<compile_context>
chip_gen: v7x
topology: tpu7x:2x2x1
jax: 0.10.0
libtpu: 0.0.40
codegen_flags: <defaults>
</compile_context>

<pallas_src>
import functools

import jax
import jax.numpy as jnp
from jax import lax
from jax.experimental import pallas as pl
from jax.experimental.pallas import tpu as pltpu


_CHUNK = 512      # lanes per register-resident sub-chunk (h1/h2 = 16 vregs each)
_MAX_TILE = 8192  # lanes per grid step (amortizes ~0.35 us per-step overhead)
_MIN_STEPS = 2    # >=2 grid steps so both v7x TensorCores get work


def knet_kernel(x_ref, w1_ref, b1_ref, w2_ref, b2_ref, w3_ref, b3_ref, o_ref,
                *, chunk, n_chunks):
    # Hoist the tiny weights once per grid step (~9 vregs total).
    w1 = w1_ref[...]   # (H, 1)
    b1 = b1_ref[...]   # (H, 1)
    w2 = w2_ref[...]   # (H, H)
    b2 = b2_ref[...]   # (H, 1)
    w3 = w3_ref[...]   # (out, H)
    b3 = b3_ref[...]   # (out, 1)

    def body(c, carry):
        start = pl.multiple_of(c * chunk, chunk)
        # (1, chunk) slice of the lane-dense input tile.
        x = x_ref[:, pl.ds(start, chunk)].astype(jnp.float32)

        # Layer 1: contraction length K=1 -> pure VPU broadcast FMA (no MXU).
        # (H,1) * (1,chunk) + (H,1) -> (H, chunk)   [16 vregs at chunk=512]
        h1 = jnp.tanh(w1 * x + b1)

        # Layer 2: lane-dense MXU matmul, f32 accumulate.
        # (H,H) @ (H,chunk) + (H,1) -> (H, chunk)
        h2 = jnp.tanh(
            jnp.dot(w2, h1, preferred_element_type=jnp.float32) + b2
        )

        # Layer 3: (out,H) @ (H,chunk) + (out,1) -> (out, chunk); the result is
        # lane-dense so the store is a full-width unmasked vst.
        out = jnp.dot(w3, h2, preferred_element_type=jnp.float32) + b3
        o_ref[:, pl.ds(start, chunk)] = out.astype(o_ref.dtype)
        return carry

    # Short, fixed trip count -> fully unroll for LLO scheduler visibility;
    # intermediates stay register-resident per chunk instead of spilling.
    lax.fori_loop(0, n_chunks, body, 0, unroll=True)


def _ceil_to(x, m):
    return ((x + m - 1) // m) * m


def _plan_tiling(n):
    """Return (n_pad, tile_n, chunk) with n_pad % tile_n == 0, tile_n % chunk == 0,
    every tile lane-dense (multiple of 128), and >=2 grid steps when feasible."""
    if n <= 256:
        # Tiny problem: one grid step, one chunk (<=8 vregs per intermediate).
        n_pad = _ceil_to(n, 128)
        return n_pad, n_pad, n_pad
    n_pad = _ceil_to(n, _CHUNK)
    steps = max(_MIN_STEPS, -(-n_pad // _MAX_TILE))       # ceil div
    tile = _ceil_to(-(-n_pad // steps), _CHUNK)
    n_pad = tile * steps
    return n_pad, tile, _CHUNK


@jax.jit
def knet_forward(psi, params):
    """psi: (N, 1) float32. params: PyTorch-layout weights (out,in), biases (out,1)."""
    n, in_dim = psi.shape
    assert in_dim == 1, "KNet takes psi of shape (N, 1)"

    w1, b1 = params["w1"], params["b1"]   # (H, 1),   (H, 1)
    w2, b2 = params["w2"], params["b2"]   # (H, H),   (H, 1)
    w3, b3 = params["w3"], params["b3"]   # (out, H), (out, 1)
    out_dim = w3.shape[0]

    n_pad, tile_n, chunk = _plan_tiling(n)
    n_chunks = tile_n // chunk

    # Transpose so N is the lane axis: (N,1) -> (1,N), then pad to lane-dense.
    x_t = psi.reshape(1, n)
    if n_pad != n:
        x_t = jnp.pad(x_t, ((0, 0), (0, n_pad - n)))

    full = lambda shape: pl.BlockSpec(shape, lambda i: (0, 0))

    out_t = pl.pallas_call(
        functools.partial(knet_kernel, chunk=chunk, n_chunks=n_chunks),
        out_shape=jax.ShapeDtypeStruct((out_dim, n_pad), psi.dtype),
        grid_spec=pltpu.PrefetchScalarGridSpec(
            num_scalar_prefetch=0,
            grid=(n_pad // tile_n,),
            in_specs=[
                pl.BlockSpec((1, tile_n), lambda i: (0, i)),   # psi (lane-dense)
                full(w1.shape), full(b1.shape),                # VMEM-resident weights
                full(w2.shape), full(b2.shape),
                full(w3.shape), full(b3.shape),
            ],
            out_specs=pl.BlockSpec((out_dim, tile_n), lambda i: (0, i)),
        ),
        compiler_params=pltpu.CompilerParams(
            dimension_semantics=("parallel",),
        ),
    )(x_t, w1, b1, w2, b2, w3, b3)

    # Back to (N, out_dim). For out_dim == 1 a reshape of the (1, n_pad) slab is
    # a zero-copy relayout (no transpose copy).
    if out_dim == 1:
        out = out_t.reshape(n_pad, 1)
    else:
        out = out_t.T
    return out[:n]


def init_knet_params(key, input_dim=1, hidden_dim=32, output_dim=1):
    """Init mimicking nn.Linear's U(-1/sqrt(fan_in), 1/sqrt(fan_in)).

    Weights stored in PyTorch (out, in) layout; biases stored as (out, 1)
    columns for broadcasting against (out, chunk) activations in the kernel.
    """
    def linear(k, fan_in, fan_out):
        kw, kb = jax.random.split(k)
        bound = 1.0 / jnp.sqrt(fan_in)
        w = jax.random.uniform(kw, (fan_out, fan_in), jnp.float32, -bound, bound)
        b = jax.random.uniform(kb, (fan_out, 1), jnp.float32, -bound, bound)
        return w, b

    k1, k2, k3 = jax.random.split(key, 3)
    w1, b1 = linear(k1, input_dim, hidden_dim)
    w2, b2 = linear(k2, hidden_dim, hidden_dim)
    w3, b3 = linear(k3, hidden_dim, output_dim)
    return {"w1": w1, "b1": b1, "w2": w2, "b2": b2, "w3": w3, "b3": b3}


def knet_reference(psi, params):
    # Standard (N, features) orientation, PyTorch semantics: x @ W.T + b.
    h1 = jnp.tanh(psi @ params["w1"].T + params["b1"].T)
    h2 = jnp.tanh(h1 @ params["w2"].T + params["b2"].T)
    return h2 @ params["w3"].T + params["b3"].T


if __name__ == "__main__":
    key = jax.random.PRNGKey(0)
    k_params, k_a, k_b, k_c = jax.random.split(key, 4)

    INPUT_DIM, HIDDEN_DIM, OUTPUT_DIM = 1, 32, 1
    params = init_knet_params(k_params, INPUT_DIM, HIDDEN_DIM, OUTPUT_DIM)

    # Tiny path: N=128 -> single grid step, single in-kernel chunk.
    psi_a = jax.random.normal(k_a, (128, INPUT_DIM), dtype=jnp.float32)
    out_a = jax.block_until_ready(knet_forward(psi_a, params))
    ref_a = knet_reference(psi_a, params)
    assert out_a.shape == (128, OUTPUT_DIM)
    assert jnp.allclose(out_a, ref_a, atol=1e-5, rtol=1e-5), "mismatch (N=128)"

    # Pad-and-slice path: N=1000 -> padded to 1024, 2 grid steps of 512 lanes
    # (exercises padding and keeps both v7x TensorCores busy).
    psi_b = jax.random.normal(k_b, (1000, INPUT_DIM), dtype=jnp.float32)
    out_b = jax.block_until_ready(knet_forward(psi_b, params))
    ref_b = knet_reference(psi_b, params)
    assert out_b.shape == (1000, OUTPUT_DIM)
    assert jnp.allclose(out_b, ref_b, atol=1e-5, rtol=1e-5), "mismatch (N=1000)"

    # Multi-chunk path: N=4096 -> 2 grid steps x 4 register-resident 512-lane chunks.
    psi_c = jax.random.normal(k_c, (4096, INPUT_DIM), dtype=jnp.float32)
    out_c = jax.block_until_ready(knet_forward(psi_c, params))
    ref_c = knet_reference(psi_c, params)
    assert out_c.shape == (4096, OUTPUT_DIM)
    assert jnp.allclose(out_c, ref_c, atol=1e-5, rtol=1e-5), "mismatch (N=4096)"

    print("KERNEL_OK")
</pallas_src>

<mosaic_0001>
module attributes {stable_mosaic.version = 11 : i64} {
  func.func @knet_kernel(%arg0: i32, %arg1: memref<1x128xf32, #tpu.memory_space<vmem>>, %arg2: memref<32x1xf32, #tpu.memory_space<vmem>>, %arg3: memref<32x1xf32, #tpu.memory_space<vmem>>, %arg4: memref<32x32xf32, #tpu.memory_space<vmem>>, %arg5: memref<32x1xf32, #tpu.memory_space<vmem>>, %arg6: memref<1x32xf32, #tpu.memory_space<vmem>>, %arg7: memref<1x1xf32, #tpu.memory_space<vmem>>, %arg8: memref<1x128xf32, #tpu.memory_space<vmem>>) attributes {dimension_semantics = [#tpu.dimension_semantics<parallel>], iteration_bounds = array<i64: 1>, scalar_prefetch = 0 : i64, scratch_operands = 0 : i64, tpu.core_type = #tpu.core_type<tc>, window_params = [{transform_indices = @transform_0, window_bounds = array<i64: 1, 128>}, {pipeline_mode = #tpu.pipeline_mode<synchronous>, transform_indices = @transform_1, window_bounds = array<i64: 32, 1>}, {pipeline_mode = #tpu.pipeline_mode<synchronous>, transform_indices = @transform_2, window_bounds = array<i64: 32, 1>}, {pipeline_mode = #tpu.pipeline_mode<synchronous>, transform_indices = @transform_3, window_bounds = array<i64: 32, 32>}, {pipeline_mode = #tpu.pipeline_mode<synchronous>, transform_indices = @transform_4, window_bounds = array<i64: 32, 1>}, {pipeline_mode = #tpu.pipeline_mode<synchronous>, transform_indices = @transform_5, window_bounds = array<i64: 1, 32>}, {pipeline_mode = #tpu.pipeline_mode<synchronous>, transform_indices = @transform_6, window_bounds = array<i64: 1, 1>}, {transform_indices = @transform_7, window_bounds = array<i64: 1, 128>}]} {
    %c0 = arith.constant 0 : index
    %c0_0 = arith.constant 0 : index
    %0 = vector.load %arg2[%c0, %c0_0] : memref<32x1xf32, #tpu.memory_space<vmem>>, vector<32x1xf32>
    %c0_1 = arith.constant 0 : index
    %c0_2 = arith.constant 0 : index
    %1 = vector.load %arg3[%c0_1, %c0_2] : memref<32x1xf32, #tpu.memory_space<vmem>>, vector<32x1xf32>
    %c0_3 = arith.constant 0 : index
    %c0_4 = arith.constant 0 : index
    %2 = vector.load %arg4[%c0_3, %c0_4] : memref<32x32xf32, #tpu.memory_space<vmem>>, vector<32x32xf32>
    %c0_5 = arith.constant 0 : index
    %c0_6 = arith.constant 0 : index
    %3 = vector.load %arg5[%c0_5, %c0_6] : memref<32x1xf32, #tpu.memory_space<vmem>>, vector<32x1xf32>
    %c0_7 = arith.constant 0 : index
    %c0_8 = arith.constant 0 : index
    %4 = vector.load %arg6[%c0_7, %c0_8] : memref<1x32xf32, #tpu.memory_space<vmem>>, vector<1x32xf32>
    %c0_9 = arith.constant 0 : index
    %c0_10 = arith.constant 0 : index
    %5 = vector.load %arg7[%c0_9, %c0_10] : memref<1x1xf32, #tpu.memory_space<vmem>>, vector<1x1xf32>
    %c0_i32 = arith.constant 0 : i32
    %c128_i32 = arith.constant 128 : i32
    %6 = arith.muli %c0_i32, %c128_i32 : i32
    %7 = tpu.assume_multiple %6, 128 : i32
    %c0_11 = arith.constant 0 : index
    %8 = arith.index_cast %7 : i32 to index
    %9 = vector.load %arg1[%c0_11, %8] : memref<1x128xf32, #tpu.memory_space<vmem>>, vector<1x128xf32>
    %10 = vector.broadcast %0 : vector<32x1xf32> to vector<32x128xf32>
    %11 = vector.broadcast %9 : vector<1x128xf32> to vector<32x128xf32>
    %12 = arith.mulf %10, %11 : vector<32x128xf32>
    %13 = vector.broadcast %1 : vector<32x1xf32> to vector<32x128xf32>
    %14 = arith.addf %12, %13 : vector<32x128xf32>
    %15 = math.tanh %14 : vector<32x128xf32>
    %cst = arith.constant dense<0.000000e+00> : vector<32x128xf32>
    %16 = tpu.matmul %2, %15, %cst {dimension_numbers = #tpu.dot_dimension_numbers<[1], [0], [0], [1], [0, 0, 1, 1], [], []>} : vector<32x32xf32>, vector<32x128xf32>, vector<32x128xf32> -> vector<32x128xf32>
    %17 = vector.broadcast %3 : vector<32x1xf32> to vector<32x128xf32>
    %18 = arith.addf %16, %17 : vector<32x128xf32>
    %19 = math.tanh %18 : vector<32x128xf32>
    %cst_12 = arith.constant dense<0.000000e+00> : vector<1x128xf32>
    %20 = tpu.matmul %4, %19, %cst_12 {dimension_numbers = #tpu.dot_dimension_numbers<[1], [0], [0], [1], [0, 0, 1, 1], [], []>} : vector<1x32xf32>, vector<32x128xf32>, vector<1x128xf32> -> vector<1x128xf32>
    %21 = vector.broadcast %5 : vector<1x1xf32> to vector<1x128xf32>
    %22 = arith.addf %20, %21 : vector<1x128xf32>
    %c0_13 = arith.constant 0 : index
    %23 = arith.index_cast %7 : i32 to index
    %24 = vector.load %arg8[%c0_13, %23] : memref<1x128xf32, #tpu.memory_space<vmem>>, vector<1x128xf32>
    tpu.vector_store %arg8[%c0_13, %23], %22 {strides = array<i32>} : memref<1x128xf32, #tpu.memory_space<vmem>>, vector<1x128xf32>,
    %c1_i32 = arith.constant 1 : i32
    return
  }
  func.func @transform_0(%arg0: i32) -> (i32, i32) {
    %c0_i32 = arith.constant 0 : i32
    %c0_i32_0 = arith.constant 0 : i32
    return %c0_i32, %arg0 : i32, i32
  }
  func.func @transform_1(%arg0: i32) -> (i32, i32) {
    %c0_i32 = arith.constant 0 : i32
    %c0_i32_0 = arith.constant 0 : i32
    %c0_i32_1 = arith.constant 0 : i32
    return %c0_i32, %c0_i32_0 : i32, i32
  }
  func.func @transform_2(%arg0: i32) -> (i32, i32) {
    %c0_i32 = arith.constant 0 : i32
    %c0_i32_0 = arith.constant 0 : i32
    %c0_i32_1 = arith.constant 0 : i32
    return %c0_i32, %c0_i32_0 : i32, i32
  }
  func.func @transform_3(%arg0: i32) -> (i32, i32) {
    %c0_i32 = arith.constant 0 : i32
    %c0_i32_0 = arith.constant 0 : i32
    %c0_i32_1 = arith.constant 0 : i32
    return %c0_i32, %c0_i32_0 : i32, i32
  }
  func.func @transform_4(%arg0: i32) -> (i32, i32) {
    %c0_i32 = arith.constant 0 : i32
    %c0_i32_0 = arith.constant 0 : i32
    %c0_i32_1 = arith.constant 0 : i32
    return %c0_i32, %c0_i32_0 : i32, i32
  }
  func.func @transform_5(%arg0: i32) -> (i32, i32) {
    %c0_i32 = arith.constant 0 : i32
    %c0_i32_0 = arith.constant 0 : i32
    %c0_i32_1 = arith.constant 0 : i32
    return %c0_i32, %c0_i32_0 : i32, i32
  }
  func.func @transform_6(%arg0: i32) -> (i32, i32) {
    %c0_i32 = arith.constant 0 : i32
    %c0_i32_0 = arith.constant 0 : i32
    %c0_i32_1 = arith.constant 0 : i32
    return %c0_i32, %c0_i32_0 : i32, i32
  }
  func.func @transform_7(%arg0: i32) -> (i32, i32) {
    %c0_i32 = arith.constant 0 : i32
    %c0_i32_0 = arith.constant 0 : i32
    return %c0_i32, %arg0 : i32, i32
  }
}

</mosaic_0001>

<llo_original>
// kernel: knet_forward.1
$region0: #{knet_forward.1}
  #allocation0 [shape = 'u32[]', space=smem, size = 0x4, offset = 0x4, fixed_abs, tag = 'smem constant byte address 0x4 - core index']
  #allocation1 [shape = 'u32[144,128]{1,0:T(1,128)}', space=vmem, size = 0x12000, scoped, tag = 'internal scratch']
  #allocation2 [shape = 'f32[1,1]{1,0:T(1,128)S(1)}', space=vmem, size = 0x200, scoped, tag = 'scoped memory for knet_forward.1']
  %s0 = inlined_call_operand.vmem [shape: f32[1,128], index: 0, kind: input, shape index: {}]
  %s1 = inlined_call_operand.vmem [shape: f32[32,1], index: 1, kind: input, shape index: {}]
  %s2 = inlined_call_operand.vmem [shape: f32[32,1], index: 2, kind: input, shape index: {}]
  %s3 = inlined_call_operand.vmem [shape: f32[32,32], index: 3, kind: input, shape index: {}]
  %s4 = inlined_call_operand.vmem [shape: f32[32,1], index: 4, kind: input, shape index: {}]
  %s5 = inlined_call_operand.vmem [shape: f32[1,32], index: 5, kind: input, shape index: {}]
  %s6 = inlined_call_operand.<no memory space> [shape: f32[1,1], index: 6, kind: input, shape index: {}]
  %s7 = inlined_call_operand.hbm [shape: f32[1,128], index: 7, kind: output, shape index: {}]
  %s8 = sld [smem:[#allocation0]]
  $region38: #{knet_forward.1} parent=0
    _
  %s10 = ssub.s32 1, %s8
  %s11 = scalar_select 0, %s10, %s8
  %v12 = vstv %s6
  %13 = vst [vmem:[#allocation2] sm:$0x1] %v12
  $region1: #{knet_forward.1} parent=0
    #allocation3 [shape = 'u8[512]{0}', space=vmem, size = 0x400, scoped, tag = 'output window, operand 0, single buffered']
    #allocation4 [shape = 's32[1]{0}', space=sflag, size = 0x4, scoped, tag = 'scoped memory for knet_forward.1']
    %14 = vsyncpa [#allocation4], 0
    // Predicated region
    $region2: #{knet_forward.1} parent=1 // pred_check
      _
    $region3: #{knet_forward.1} parent=1 // pred_check_branch
      %16 = sbr.rel (0) target = $region5
    $region4: #{knet_forward.1} parent=1 // pred_region
      _
    $region5: #{knet_forward.1} parent=1 // pred_fallthru
      _
    // Predicated region
    $region6: #{knet_forward.1} parent=1 // pred_check
      _
    $region7: #{knet_forward.1} parent=1 // pred_check_branch
      %18 = sbr.rel (0) target = $region9
    $region8: #{knet_forward.1} parent=1 // pred_region
      _
    $region9: #{knet_forward.1} parent=1 // pred_fallthru
      _
    // Predicated region
    $region10: #{knet_forward.1} parent=1 // pred_check
      _
    $region11: #{knet_forward.1} parent=1 // pred_check_branch
      %20 = sbr.rel (0) target = $region13
    $region12: #{knet_forward.1} parent=1 // pred_region
      _
    $region13: #{knet_forward.1} parent=1 // pred_fallthru
      _
    // Predicated region
    $region14: #{knet_forward.1} parent=1 // pred_check
      _
    $region15: #{knet_forward.1} parent=1 // pred_check_branch
      %22 = sbr.rel (0) target = $region17
    $region16: #{knet_forward.1} parent=1 // pred_region
      _
    $region17: #{knet_forward.1} parent=1 // pred_fallthru
      _
    // Predicated region
    $region18: #{knet_forward.1} parent=1 // pred_check
      _
    $region19: #{knet_forward.1} parent=1 // pred_check_branch
      %24 = sbr.rel (0) target = $region21
    $region20: #{knet_forward.1} parent=1 // pred_region
      _
    $region21: #{knet_forward.1} parent=1 // pred_fallthru
      _
    // Predicated region
    $region22: #{knet_forward.1} parent=1 // pred_check
      _
    $region23: #{knet_forward.1} parent=1 // pred_check_branch
      %26 = sbr.rel (0) target = $region25
    $region24: #{knet_forward.1} parent=1 // pred_region
      _
    $region25: #{knet_forward.1} parent=1 // pred_fallthru
      _
    // Predicated region
    $region26: #{knet_forward.1} parent=1 // pred_check
      _
    $region27: #{knet_forward.1} parent=1 // pred_check_branch
      %28 = sbr.rel (0) target = $region29
    $region28: #{knet_forward.1} parent=1 // pred_region
      _
    $region29: #{knet_forward.1} parent=1 // pred_fallthru
      _
    %v29 = vld [vmem:[%s1] sm:$0xff]
    %v30 = vld [vmem:[%s1 + $0x8] sm:$0xff]
    %v31 = vld [vmem:[%s1 + $0x10] sm:$0xff]
    %v32 = vld [vmem:[%s1 + $0x18] sm:$0xff]
    %v33 = vld [vmem:[%s2] sm:$0xff]
    %v34 = vld [vmem:[%s2 + $0x8] sm:$0xff]
    %v35 = vld [vmem:[%s2 + $0x10] sm:$0xff]
    %v36 = vld [vmem:[%s2 + $0x18] sm:$0xff]
    %v37 = vld [vmem:[%s3] sm:$0xff]
    %v38 = vld [vmem:[%s3 + $0x8] sm:$0xff]
    %v39 = vld [vmem:[%s3 + $0x10] sm:$0xff]
    %v40 = vld [vmem:[%s3 + $0x18] sm:$0xff]
    %v41 = vld [vmem:[%s4] sm:$0xff]
    %v42 = vld [vmem:[%s4 + $0x8] sm:$0xff]
    %v43 = vld [vmem:[%s4 + $0x10] sm:$0xff]
    %v44 = vld [vmem:[%s4 + $0x18] sm:$0xff]
    %v45 = vld [vmem:[%s5] sm:$0x1]
    %v46 = vld [vmem:[#allocation2] sm:$0x1]
    %v47 = vld [vmem:[%s0] sm:$0x1]
    %49 = vset.pattern.permute.xlu0 0
    %50 = vperm.xlu0 %49, %v29
    %v51 = vpop.permute.xlu0 %50
    %54 = vset.pattern.permute.xlu0 0
    %55 = vperm.xlu0 %54, %v30
    %v56 = vpop.permute.xlu0 %55
    %59 = vset.pattern.permute.xlu0 0
    %60 = vperm.xlu0 %59, %v31
    %v61 = vpop.permute.xlu0 %60
    %64 = vset.pattern.permute.xlu0 0
    %65 = vperm.xlu0 %64, %v32
    %v66 = vpop.permute.xlu0 %65
    %v69 = vlaneseq
    %v70 = vshrl.u32 %v69, 7
    %v71 = vsub.s32 0, %v70
    %v72 = vrot.slane %v47, %v71
    %v74 = vmul.f32 %v51, %v72
    %v75 = vmul.f32 %v56, %v72
    %v76 = vmul.f32 %v61, %v72
    %v77 = vmul.f32 %v66, %v72
    %79 = vset.pattern.permute.xlu0 0
    %80 = vperm.xlu0 %79, %v33
    %v81 = vpop.permute.xlu0 %80
    %84 = vset.pattern.permute.xlu0 0
    %85 = vperm.xlu0 %84, %v34
    %v86 = vpop.permute.xlu0 %85
    %89 = vset.pattern.permute.xlu0 0
    %90 = vperm.xlu0 %89, %v35
    %v91 = vpop.permute.xlu0 %90
    %94 = vset.pattern.permute.xlu0 0
    %95 = vperm.xlu0 %94, %v36
    %v96 = vpop.permute.xlu0 %95
    %v98 = vadd.f32 %v74, %v81
    %v99 = vadd.f32 %v75, %v86
    %v100 = vadd.f32 %v76, %v91
    %v101 = vadd.f32 %v77, %v96
    %v102 = vtanh.pop %v98
    %v103 = vtanh.pop %v99
    %v104 = vtanh.pop %v100
    %v105 = vtanh.pop %v101
    %107 = vset.pattern.permute.xlu0 0
    %108 = vperm.xlu0 %107, %v41
    %v109 = vpop.permute.xlu0 %108
    %112 = vset.pattern.permute.xlu0 0
    %113 = vperm.xlu0 %112, %v42
    %v114 = vpop.permute.xlu0 %113
    %117 = vset.pattern.permute.xlu0 0
    %118 = vperm.xlu0 %117, %v43
    %v119 = vpop.permute.xlu0 %118
    %122 = vset.pattern.permute.xlu0 0
    %123 = vperm.xlu0 %122, %v44
    %v124 = vpop.permute.xlu0 %123
    %vm126 = vcmask 261120
    %v128 = vsel %vm126, %v37, 0
    %v131 = vsel %vm126, %v38, 0
    %v134 = vsel %vm126, %v39, 0
    %v137 = vsel %vm126, %v40, 0
    %139 = vmatprep.subr.mxu0 0.0
    %140 = vmatpush1.msra.mxu0 %v102
    %141 = vmatprep.subr.mxu0 0.0
    %142 = vmatpush1.msra.mxu0 %v103
    %143 = vmatprep.subr.mxu0 0.0
    %144 = vmatpush1.msra.mxu0 %v104
    %145 = vmatprep.subr.mxu0 0.0
    %146 = vmatpush1.msra.mxu0 %v105
    %147 = vmatprep.subr.mxu0 0.0
    %148 = vmatpush1.msra.mxu0 0.0
    %149 = vmatprep.subr.mxu0 0.0
    %150 = vmatpush1.msra.mxu0 0.0
    %151 = vmatprep.subr.mxu0 0.0
    %152 = vmatpush1.msra.mxu0 0.0
    %153 = vmatprep.subr.mxu0 0.0
    %154 = vmatpush1.msra.mxu0 0.0
    %155 = vmatprep.subr.mxu0 0.0
    %156 = vmatpush1.msra.mxu0 0.0
    %157 = vmatprep.subr.mxu0 0.0
    %158 = vmatpush1.msra.mxu0 0.0
    %159 = vmatprep.subr.mxu0 0.0
    %160 = vmatpush1.msra.mxu0 0.0
    %161 = vmatprep.subr.mxu0 0.0
    %162 = vmatpush1.msra.mxu0 0.0
    %163 = vmatprep.subr.mxu0 0.0
    %164 = vmatpush1.msra.mxu0 0.0
    %165 = vmatprep.subr.mxu0 0.0
    %166 = vmatpush1.msra.mxu0 0.0
    %167 = vmatprep.subr.mxu0 0.0
    %168 = vmatpush1.msra.mxu0 0.0
    %169 = vmatprep.subr.mxu0 0.0
    %170 = vmatpush1.msra.mxu0 0.0
    %171 = vmatprep.subr.mxu0 0.0
    %172 = vmatpush1.msra.mxu0 0.0
    %173 = vmatprep.subr.mxu0 0.0
    %174 = vmatpush1.msra.mxu0 0.0
    %175 = vmatprep.subr.mxu0 0.0
    %176 = vmatpush1.msra.mxu0 0.0
    %177 = vmatprep.subr.mxu0 0.0
    %178 = vmatpush1.msra.mxu0 0.0
    %179 = vmatprep.subr.mxu0 0.0
    %180 = vmatpush1.msra.mxu0 0.0
    %181 = vmatprep.subr.mxu0 0.0
    %182 = vmatpush1.msra.mxu0 0.0
    %183 = vmatprep.subr.mxu0 0.0
    %184 = vmatpush1.msra.mxu0 0.0
    %185 = vmatprep.subr.mxu0 0.0
    %186 = vmatpush1.msra.mxu0 0.0
    %187 = vmatprep.subr.mxu0 0.0
    %188 = vmatpush1.msra.mxu0 0.0
    %189 = vmatprep.subr.mxu0 0.0
    %190 = vmatpush1.msra.mxu0 0.0
    %191 = vmatprep.subr.mxu0 0.0
    %192 = vmatpush1.msra.mxu0 0.0
    %193 = vmatprep.subr.mxu0 0.0
    %194 = vmatpush1.msra.mxu0 0.0
    %195 = vmatprep.subr.mxu0 0.0
    %196 = vmatpush1.msra.mxu0 0.0
    %197 = vmatprep.subr.mxu0 0.0
    %198 = vmatpush1.msra.mxu0 0.0
    %199 = vmatprep.subr.mxu0 0.0
    %200 = vmatpush1.msra.mxu0 0.0
    %201 = vmatprep.subr.mxu0 0.0
    %202 = vmatpush1.msra.mxu0 0.0
    %203 = vmatprep.mubr.f32.mxu0 0.0
    %204 = vmatmul.mubr.f32.gmra.mrb[0].mxu0 %v128
    %v205 = vpop.f32.mrb[0].mxu0
    %v206 = vadd.f32 %v109, %v205
    %v207 = vpop.f32.mrb[0].mxu0
    %208 = vmatprep.mubr.f32.mxu0 0.0
    %209 = vmatmul.mubr.f32.gmra.mrb[0].mxu0 %v131
    %v210 = vpop.f32.mrb[0].mxu0
    %v211 = vadd.f32 %v114, %v210
    %v212 = vpop.f32.mrb[0].mxu0
    %213 = vmatprep.mubr.f32.mxu0 0.0
    %214 = vmatmul.mubr.f32.gmra.mrb[0].mxu0 %v134
    %v215 = vpop.f32.mrb[0].mxu0
    %v216 = vadd.f32 %v119, %v215
    %v217 = vpop.f32.mrb[0].mxu0
    %218 = vmatprep.mubr.f32.mxu0 0.0
    %219 = vmatmul.mubr.f32.gmra.mrb[0].mxu0 %v137
    %v220 = vpop.f32.mrb[0].mxu0
    %v221 = vadd.f32 %v124, %v220
    %v222 = vpop.f32.mrb[0].mxu0
    %223 = vdwg.mxu0
    %v224 = vtanh.pop %v206
    %v225 = vtanh.pop %v211
    %v226 = vtanh.pop %v216
    %v227 = vtanh.pop %v221
    %229 = vset.pattern.permute.xlu0 0
    %230 = vperm.xlu0 %229, %v46
    %v231 = vpop.permute.xlu0 %230
    %v233 = vlaneseq
    %v234 = vshrl.u32 %v233, 7
    %v235 = vsub.s32 0, %v234
    %v236 = vrot.slane %v231, %v235
    %v238 = vsel %vm126, %v45, 0
    %240 = vmatprep.subr.mxu0 0.0
    %241 = vmatpush1.msra.mxu0 %v224
    %242 = vmatprep.subr.mxu0 0.0
    %243 = vmatpush1.msra.mxu0 %v225
    %244 = vmatprep.subr.mxu0 0.0
    %245 = vmatpush1.msra.mxu0 %v226
    %246 = vmatprep.subr.mxu0 0.0
    %247 = vmatpush1.msra.mxu0 %v227
    %248 = vmatprep.subr.mxu0 0.0
    %249 = vmatpush1.msra.mxu0 0.0
    %250 = vmatprep.subr.mxu0 0.0
    %251 = vmatpush1.msra.mxu0 0.0
    %252 = vmatprep.subr.mxu0 0.0
    %253 = vmatpush1.msra.mxu0 0.0
    %254 = vmatprep.subr.mxu0 0.0
    %255 = vmatpush1.msra.mxu0 0.0
    %256 = vmatprep.subr.mxu0 0.0
    %257 = vmatpush1.msra.mxu0 0.0
    %258 = vmatprep.subr.mxu0 0.0
    %259 = vmatpush1.msra.mxu0 0.0
    %260 = vmatprep.subr.mxu0 0.0
    %261 = vmatpush1.msra.mxu0 0.0
    %262 = vmatprep.subr.mxu0 0.0
    %263 = vmatpush1.msra.mxu0 0.0
    %264 = vmatprep.subr.mxu0 0.0
    %265 = vmatpush1.msra.mxu0 0.0
    %266 = vmatprep.subr.mxu0 0.0
    %267 = vmatpush1.msra.mxu0 0.0
    %268 = vmatprep.subr.mxu0 0.0
    %269 = vmatpush1.msra.mxu0 0.0
    %270 = vmatprep.subr.mxu0 0.0
    %271 = vmatpush1.msra.mxu0 0.0
    %272 = vmatprep.subr.mxu0 0.0
    %273 = vmatpush1.msra.mxu0 0.0
    %274 = vmatprep.subr.mxu0 0.0
    %275 = vmatpush1.msra.mxu0 0.0
    %276 = vmatprep.subr.mxu0 0.0
    %277 = vmatpush1.msra.mxu0 0.0
    %278 = vmatprep.subr.mxu0 0.0
    %279 = vmatpush1.msra.mxu0 0.0
    %280 = vmatprep.subr.mxu0 0.0
    %281 = vmatpush1.msra.mxu0 0.0
    %282 = vmatprep.subr.mxu0 0.0
    %283 = vmatpush1.msra.mxu0 0.0
    %284 = vmatprep.subr.mxu0 0.0
    %285 = vmatpush1.msra.mxu0 0.0
    %286 = vmatprep.subr.mxu0 0.0
    %287 = vmatpush1.msra.mxu0 0.0
    %288 = vmatprep.subr.mxu0 0.0
    %289 = vmatpush1.msra.mxu0 0.0
    %290 = vmatprep.subr.mxu0 0.0
    %291 = vmatpush1.msra.mxu0 0.0
    %292 = vmatprep.subr.mxu0 0.0
    %293 = vmatpush1.msra.mxu0 0.0
    %294 = vmatprep.subr.mxu0 0.0
    %295 = vmatpush1.msra.mxu0 0.0
    %296 = vmatprep.subr.mxu0 0.0
    %297 = vmatpush1.msra.mxu0 0.0
    %298 = vmatprep.subr.mxu0 0.0
    %299 = vmatpush1.msra.mxu0 0.0
    %300 = vmatprep.subr.mxu0 0.0
    %301 = vmatpush1.msra.mxu0 0.0
    %302 = vmatprep.subr.mxu0 0.0
    %303 = vmatpush1.msra.mxu0 0.0
    %304 = vmatprep.mubr.f32.mxu0 0.0
    %305 = vmatmul.mubr.f32.gmra.mrb[0].mxu0 %v238
    %v306 = vpop.f32.mrb[0].mxu0
    %v307 = vadd.f32 %v236, %v306
    %v308 = vpop.f32.mrb[0].mxu0
    %309 = vdwg.mxu0
    %310 = vst [vmem:[#allocation3] sm:$0x1] %v307
    // Predicated region
    $region30: #{knet_forward.1} parent=1 // pred_check
      _
    $region31: #{knet_forward.1} parent=1 // pred_check_branch
      %312 = sbr.rel (0) target = $region33
    $region32: #{knet_forward.1} parent=1 // pred_region
      %s314 = ssub.s32 16, 16
      %315 = vsyncadd [#allocation4], %s314
      %s317 = sshll.u32 [#allocation3], 4
      %s318 = int_to_ptr.vmem [resolvable:$true] %s317
      %320 = dma.vmem_to_hbm [thread:$0]  %s318, 16, %s7, [#allocation4]
    $region33: #{knet_forward.1} parent=1 // pred_fallthru
      _
    // Predicated region
    $region34: #{knet_forward.1} parent=1 // pred_check
      _
    $region35: #{knet_forward.1} parent=1 // pred_check_branch
      %322 = sbr.rel (0) target = $region37
    $region36: #{knet_forward.1} parent=1 // pred_region
      %323 = dma.done [#allocation4], 16
    $region37: #{knet_forward.1} parent=1 // pred_fallthru
      _
    %324 = vsyncpa [#allocation4], 1

</llo_original>
